<compile_context>
chip_gen: v7x
topology: tpu7x:2x2x1
jax: 0.10.0
libtpu: 0.0.40
codegen_flags: <defaults>
</compile_context>

<pallas_src>
import jax
import jax.numpy as jnp
from jax.experimental import pallas as pl
from jax.experimental.pallas import tpu as pltpu


_LANE = 128
_IMG = 28 * 28          # 784 = 6*128 + 16 -> lane-sparse on its own
_PACK = 8               # 8 images = 6272 elements = 49 full 128-lane vreg rows


def _round_up(n, m):
    return ((n + m - 1) // m) * m


def _tuning():
    """Per-TPU-generation (repacked tile rows, scoped VMEM limit in bytes)."""
    try:
        info = pltpu.get_tpu_info()
        vmem_bytes = getattr(info, "vmem_capacity_bytes", None)
    except Exception:
        vmem_bytes = None
    if vmem_bytes is not None and vmem_bytes >= 96 * 1024 * 1024:
        # v5e / v6e: 128 MiB VMEM.  Bigger block amortizes the ~0.35 us/step
        # grid overhead; 64 MiB scoped limit is the raise v5e needs past its
        # 16 MiB default and is harmless on v6e's 32 MiB default.
        return 512, 64 * 1024 * 1024
    # v7x (64 MiB physical, 32 MiB default scoped) or unknown part: moderate
    # block (~6.1 MiB, ~24.5 MiB double-buffered) and leave compiler headroom.
    return 256, 40 * 1024 * 1024


def _make_kernel(func):
    def kernel(x_ref, o_ref):
        # Elementwise `func` fuses for free with the DMA-bound data movement.
        o_ref[...] = func(x_ref[...])
    return kernel


def _pick_tile(rows, max_tile_rows):
    if rows > max_tile_rows:
        return max_tile_rows
    if rows >= 16:
        # Force >= 2 grid steps so dimension_semantics=("parallel",) can shard
        # the copy across v7x's two TensorCores (no-op on single-TC v5e/v6e).
        return min(_round_up(pl.cdiv(rows, 2), 8), max_tile_rows)
    return rows  # full extent is always a legal block shape


def _pallas_apply_2d(x2d, func, max_tile_rows, vmem_limit, *, donate=False):
    """Apply elementwise `func` to a 2-D array, batch-tiled over the lead axis."""
    rows, cols = x2d.shape
    tb = _pick_tile(rows, max_tile_rows)
    itemsize = jnp.dtype(x2d.dtype).itemsize
    return pl.pallas_call(
        _make_kernel(func),
        out_shape=jax.ShapeDtypeStruct((rows, cols), x2d.dtype),
        grid=(pl.cdiv(rows, tb),),
        in_specs=[pl.BlockSpec((tb, cols), lambda i: (i, 0))],
        out_specs=pl.BlockSpec((tb, cols), lambda i: (i, 0)),
        # Caller no longer needs x -> write the result into x's HBM buffer.
        input_output_aliases=({0: 0} if donate else {}),
        # Pure-bandwidth op: tell XLA's scheduler so neighboring HLOs overlap.
        cost_estimate=pl.CostEstimate(
            flops=rows * cols,              # rough elementwise estimate
            transcendentals=0,
            bytes_accessed=2 * rows * cols * itemsize,
        ),
        compiler_params=pltpu.CompilerParams(
            dimension_semantics=("parallel",),
            vmem_limit_bytes=vmem_limit,
        ),
    )(x2d)


class Lambda:
    """JAX/Pallas port of the tutorial's Lambda(nn.Module): forward(x) = func(x)."""

    def __init__(self, func):
        self.func = func

    def __call__(self, inputs):
        return self.func(inputs)


def preprocess_view(x):
    """x.view(-1, 1, 28, 28) is metadata-only: the fastest exact port is no kernel."""
    return x.reshape(-1, 1, 28, 28)


def pallas_preprocess(x, elementwise_func=None, donate=False):
    """Preprocess to (-1, 1, 28, 28), optionally fusing an elementwise `func`
    into the (DMA-bound) data movement via Pallas.

    * elementwise_func is None (the tutorial's case): short-circuit to the
      metadata-only reshape — any kernel would only add HBM traffic.
    * elementwise_func given: run it in a lane-dense Pallas kernel.  Odd
      batches split so essentially all bytes take the lane-dense path.
    * donate=True: alias output onto input (no second HBM allocation).
    """
    b, f = x.shape
    assert f == _IMG, f"expected flattened 28x28 images, got feature dim {f}"

    if elementwise_func is None:
        return preprocess_view(x)

    tile_rows, vmem_limit = _tuning()
    b8 = (b // _PACK) * _PACK

    parts = []
    if b8 > 0:
        # Lane-dense repack (metadata-only): every output vreg row is fully
        # populated -> unmasked vst instead of 784-wide masked vst.msk tails.
        packed = x[:b8].reshape(b8 // _PACK, _PACK * f)
        out = _pallas_apply_2d(packed, elementwise_func, tile_rows, vmem_limit,
                               donate=(donate and b8 == b))
        parts.append(out.reshape(b8, f))
    if b > b8:
        # <=7 leftover images: lane-sparse layout, but a negligible byte count.
        parts.append(_pallas_apply_2d(x[b8:], elementwise_func,
                                      tile_rows, vmem_limit))

    out = parts[0] if len(parts) == 1 else jnp.concatenate(parts, axis=0)
    return out.reshape(b, 1, 28, 28)


if __name__ == "__main__":
    k0, k1, k2 = jax.random.split(jax.random.PRNGKey(0), 3)

    # 1) Tutorial semantics (func is the view): metadata-only fast path, no kernel.
    B = 64
    x = jax.random.normal(k0, (B, 28 * 28), dtype=jnp.float32)
    preprocess = Lambda(pallas_preprocess)
    y = jax.block_until_ready(preprocess(x))
    assert y.shape == (B, 1, 28, 28), y.shape
    assert y.dtype == x.dtype, y.dtype
    assert bool(jnp.array_equal(y, x.reshape(B, 1, 28, 28)))

    # 2) Pallas fusion scaffold with an identity elementwise func (lane-dense path).
    ident = Lambda(lambda a: pallas_preprocess(a, elementwise_func=lambda v: v))
    y2 = jax.block_until_ready(ident(x))
    assert bool(jnp.array_equal(y2, x.reshape(B, 1, 28, 28)))

    # 3) Real elementwise func fused into the copy, odd batch (prefix+tail split).
    B3 = 11
    x3 = jax.random.normal(k1, (B3, 28 * 28), dtype=jnp.float32)
    y3 = jax.block_until_ready(
        pallas_preprocess(x3, elementwise_func=lambda v: 2.0 * v + 1.0))
    ref3 = (2.0 * x3 + 1.0).reshape(B3, 1, 28, 28)
    assert bool(jnp.allclose(y3, ref3, atol=0.0, rtol=0.0))

    # 4) donate path: output aliases the input buffer (second HBM buffer elided
    #    when the caller jits with donate_argnums; correct either way).
    B4 = 16
    x4 = jax.random.normal(k2, (B4, 28 * 28), dtype=jnp.float32)
    ref4 = jnp.asarray(jax.device_get(x4).reshape(B4, 1, 28, 28))
    y4 = jax.block_until_ready(
        pallas_preprocess(x4, elementwise_func=lambda v: v, donate=True))
    assert bool(jnp.array_equal(y4, ref4))

    print("KERNEL_OK")
</pallas_src>

<mosaic_0001>
module attributes {stable_mosaic.version = 11 : i64} {
  func.func @kernel(%arg0: i32, %arg1: memref<8x6272xf32, #tpu.memory_space<vmem>>, %arg2: memref<8x6272xf32, #tpu.memory_space<vmem>>) attributes {dimension_semantics = [#tpu.dimension_semantics<parallel>], iteration_bounds = array<i64: 1>, scalar_prefetch = 0 : i64, scratch_operands = 0 : i64, tpu.core_type = #tpu.core_type<tc>, window_params = [{transform_indices = @transform_0, window_bounds = array<i64: 8, 6272>}, {transform_indices = @transform_1, window_bounds = array<i64: 8, 6272>}]} {
    %c0 = arith.constant 0 : index
    %c0_0 = arith.constant 0 : index
    %0 = vector.load %arg1[%c0, %c0_0] : memref<8x6272xf32, #tpu.memory_space<vmem>>, vector<8x6272xf32>
    %c0_1 = arith.constant 0 : index
    %c0_2 = arith.constant 0 : index
    %1 = vector.load %arg2[%c0_1, %c0_2] : memref<8x6272xf32, #tpu.memory_space<vmem>>, vector<8x6272xf32>
    tpu.vector_store %arg2[%c0_1, %c0_2], %0 {strides = array<i32>} : memref<8x6272xf32, #tpu.memory_space<vmem>>, vector<8x6272xf32>,
    return
  }
  func.func @transform_0(%arg0: i32) -> (i32, i32) {
    %c0_i32 = arith.constant 0 : i32
    %c0_i32_0 = arith.constant 0 : i32
    return %arg0, %c0_i32 : i32, i32
  }
  func.func @transform_1(%arg0: i32) -> (i32, i32) {
    %c0_i32 = arith.constant 0 : i32
    %c0_i32_0 = arith.constant 0 : i32
    return %arg0, %c0_i32 : i32, i32
  }
}

</mosaic_0001>

<llo_original>
// kernel: tpu_custom_call.1
$region0: #{tpu_custom_call.1}
  #allocation0 [shape = 'u32[]', space=smem, size = 0x4, offset = 0x4, fixed_abs, tag = 'smem constant byte address 0x4 - core index']
  #allocation1 [shape = 'u32[144,128]{1,0:T(1,128)}', space=vmem, size = 0x12000, scoped, tag = 'internal scratch']
  %s0 = inlined_call_operand.hbm [shape: f32[8,6272], index: 0, kind: input, shape index: {}]
  %s1 = inlined_call_operand.hbm [shape: f32[8,6272], index: 1, kind: output, shape index: {}]
  %s2 = sld [smem:[#allocation0]]
  $region18: #{tpu_custom_call.1} parent=0
    _
  %s4 = ssub.s32 1, %s2
  %s5 = scalar_select 0, %s4, %s2
  $region1: #{tpu_custom_call.1} parent=0
    #allocation2 [shape = 'u8[200704]{0}', space=vmem, size = 0x31000, scoped, tag = 'input window, operand 0, single buffered']
    #allocation3 [shape = 's32[1]{0}', space=sflag, size = 0x4, scoped, tag = 'scoped memory for tpu_custom_call.1']
    #allocation4 [shape = 's32[1]{0}', space=sflag, size = 0x4, scoped, tag = 'scoped memory for tpu_custom_call.1']
    #allocation5 [shape = 'u8[200704]{0}', space=vmem, size = 0x31000, scoped, tag = 'output window, operand 0, single buffered']
    %6 = vsyncpa [#allocation3], 0
    %7 = vsyncpa [#allocation4], 0
    // Predicated region
    $region2: #{tpu_custom_call.1} parent=1 // pred_check
      _
    $region3: #{tpu_custom_call.1} parent=1 // pred_check_branch
      %9 = sbr.rel (0) target = $region5
    $region4: #{tpu_custom_call.1} parent=1 // pred_region
      %s11 = ssub.s32 6272, 6272
      %12 = vsyncadd [#allocation3], %s11
      %s14 = sshll.u32 [#allocation2], 4
      %s15 = int_to_ptr.vmem [resolvable:$true] %s14
      %17 = dma.hbm_to_vmem [thread:$0]  %s0, 6272, %s15, [#allocation3]
    $region5: #{tpu_custom_call.1} parent=1 // pred_fallthru
      _
    // Predicated region
    $region6: #{tpu_custom_call.1} parent=1 // pred_check
      _
    $region7: #{tpu_custom_call.1} parent=1 // pred_check_branch
      %19 = sbr.rel (0) target = $region9
    $region8: #{tpu_custom_call.1} parent=1 // pred_region
      %20 = dma.done [#allocation3], 6272
    $region9: #{tpu_custom_call.1} parent=1 // pred_fallthru
      _
    %v21 = vld [vmem:[#allocation2] sm:$0xff]
    %v22 = vld [vmem:[#allocation2 + $0x8] sm:$0xff]
    %v23 = vld [vmem:[#allocation2 + $0x10] sm:$0xff]
    %v24 = vld [vmem:[#allocation2 + $0x18] sm:$0xff]
    %v25 = vld [vmem:[#allocation2 + $0x20] sm:$0xff]
    %v26 = vld [vmem:[#allocation2 + $0x28] sm:$0xff]
    %v27 = vld [vmem:[#allocation2 + $0x30] sm:$0xff]
    %v28 = vld [vmem:[#allocation2 + $0x38] sm:$0xff]
    %v29 = vld [vmem:[#allocation2 + $0x40] sm:$0xff]
    %v30 = vld [vmem:[#allocation2 + $0x48] sm:$0xff]
    %v31 = vld [vmem:[#allocation2 + $0x50] sm:$0xff]
    %v32 = vld [vmem:[#allocation2 + $0x58] sm:$0xff]
    %v33 = vld [vmem:[#allocation2 + $0x60] sm:$0xff]
    %v34 = vld [vmem:[#allocation2 + $0x68] sm:$0xff]
    %v35 = vld [vmem:[#allocation2 + $0x70] sm:$0xff]
    %v36 = vld [vmem:[#allocation2 + $0x78] sm:$0xff]
    %v37 = vld [vmem:[#allocation2 + $0x80] sm:$0xff]
    %v38 = vld [vmem:[#allocation2 + $0x88] sm:$0xff]
    %v39 = vld [vmem:[#allocation2 + $0x90] sm:$0xff]
    %v40 = vld [vmem:[#allocation2 + $0x98] sm:$0xff]
    %v41 = vld [vmem:[#allocation2 + $0xa0] sm:$0xff]
    %v42 = vld [vmem:[#allocation2 + $0xa8] sm:$0xff]
    %v43 = vld [vmem:[#allocation2 + $0xb0] sm:$0xff]
    %v44 = vld [vmem:[#allocation2 + $0xb8] sm:$0xff]
    %v45 = vld [vmem:[#allocation2 + $0xc0] sm:$0xff]
    %v46 = vld [vmem:[#allocation2 + $0xc8] sm:$0xff]
    %v47 = vld [vmem:[#allocation2 + $0xd0] sm:$0xff]
    %v48 = vld [vmem:[#allocation2 + $0xd8] sm:$0xff]
    %v49 = vld [vmem:[#allocation2 + $0xe0] sm:$0xff]
    %v50 = vld [vmem:[#allocation2 + $0xe8] sm:$0xff]
    %v51 = vld [vmem:[#allocation2 + $0xf0] sm:$0xff]
    %v52 = vld [vmem:[#allocation2 + $0xf8] sm:$0xff]
    %v53 = vld [vmem:[#allocation2 + $0x100] sm:$0xff]
    %v54 = vld [vmem:[#allocation2 + $0x108] sm:$0xff]
    %v55 = vld [vmem:[#allocation2 + $0x110] sm:$0xff]
    %v56 = vld [vmem:[#allocation2 + $0x118] sm:$0xff]
    %v57 = vld [vmem:[#allocation2 + $0x120] sm:$0xff]
    %v58 = vld [vmem:[#allocation2 + $0x128] sm:$0xff]
    %v59 = vld [vmem:[#allocation2 + $0x130] sm:$0xff]
    %v60 = vld [vmem:[#allocation2 + $0x138] sm:$0xff]
    %v61 = vld [vmem:[#allocation2 + $0x140] sm:$0xff]
    %v62 = vld [vmem:[#allocation2 + $0x148] sm:$0xff]
    %v63 = vld [vmem:[#allocation2 + $0x150] sm:$0xff]
    %v64 = vld [vmem:[#allocation2 + $0x158] sm:$0xff]
    %v65 = vld [vmem:[#allocation2 + $0x160] sm:$0xff]
    %v66 = vld [vmem:[#allocation2 + $0x168] sm:$0xff]
    %v67 = vld [vmem:[#allocation2 + $0x170] sm:$0xff]
    %v68 = vld [vmem:[#allocation2 + $0x178] sm:$0xff]
    %v69 = vld [vmem:[#allocation2 + $0x180] sm:$0xff]
    %70 = vst [vmem:[#allocation5] sm:$0xff] %v21
    %71 = vst [vmem:[#allocation5 + $0x8] sm:$0xff] %v22
    %72 = vst [vmem:[#allocation5 + $0x10] sm:$0xff] %v23
    %73 = vst [vmem:[#allocation5 + $0x18] sm:$0xff] %v24
    %74 = vst [vmem:[#allocation5 + $0x20] sm:$0xff] %v25
    %75 = vst [vmem:[#allocation5 + $0x28] sm:$0xff] %v26
    %76 = vst [vmem:[#allocation5 + $0x30] sm:$0xff] %v27
    %77 = vst [vmem:[#allocation5 + $0x38] sm:$0xff] %v28
    %78 = vst [vmem:[#allocation5 + $0x40] sm:$0xff] %v29
    %79 = vst [vmem:[#allocation5 + $0x48] sm:$0xff] %v30
    %80 = vst [vmem:[#allocation5 + $0x50] sm:$0xff] %v31
    %81 = vst [vmem:[#allocation5 + $0x58] sm:$0xff] %v32
    %82 = vst [vmem:[#allocation5 + $0x60] sm:$0xff] %v33
    %83 = vst [vmem:[#allocation5 + $0x68] sm:$0xff] %v34
    %84 = vst [vmem:[#allocation5 + $0x70] sm:$0xff] %v35
    %85 = vst [vmem:[#allocation5 + $0x78] sm:$0xff] %v36
    %86 = vst [vmem:[#allocation5 + $0x80] sm:$0xff] %v37
    %87 = vst [vmem:[#allocation5 + $0x88] sm:$0xff] %v38
    %88 = vst [vmem:[#allocation5 + $0x90] sm:$0xff] %v39
    %89 = vst [vmem:[#allocation5 + $0x98] sm:$0xff] %v40
    %90 = vst [vmem:[#allocation5 + $0xa0] sm:$0xff] %v41
    %91 = vst [vmem:[#allocation5 + $0xa8] sm:$0xff] %v42
    %92 = vst [vmem:[#allocation5 + $0xb0] sm:$0xff] %v43
    %93 = vst [vmem:[#allocation5 + $0xb8] sm:$0xff] %v44
    %94 = vst [vmem:[#allocation5 + $0xc0] sm:$0xff] %v45
    %95 = vst [vmem:[#allocation5 + $0xc8] sm:$0xff] %v46
    %96 = vst [vmem:[#allocation5 + $0xd0] sm:$0xff] %v47
    %97 = vst [vmem:[#allocation5 + $0xd8] sm:$0xff] %v48
    %98 = vst [vmem:[#allocation5 + $0xe0] sm:$0xff] %v49
    %99 = vst [vmem:[#allocation5 + $0xe8] sm:$0xff] %v50
    %100 = vst [vmem:[#allocation5 + $0xf0] sm:$0xff] %v51
    %101 = vst [vmem:[#allocation5 + $0xf8] sm:$0xff] %v52
    %102 = vst [vmem:[#allocation5 + $0x100] sm:$0xff] %v53
    %103 = vst [vmem:[#allocation5 + $0x108] sm:$0xff] %v54
    %104 = vst [vmem:[#allocation5 + $0x110] sm:$0xff] %v55
    %105 = vst [vmem:[#allocation5 + $0x118] sm:$0xff] %v56
    %106 = vst [vmem:[#allocation5 + $0x120] sm:$0xff] %v57
    %107 = vst [vmem:[#allocation5 + $0x128] sm:$0xff] %v58
    %108 = vst [vmem:[#allocation5 + $0x130] sm:$0xff] %v59
    %109 = vst [vmem:[#allocation5 + $0x138] sm:$0xff] %v60
    %110 = vst [vmem:[#allocation5 + $0x140] sm:$0xff] %v61
    %111 = vst [vmem:[#allocation5 + $0x148] sm:$0xff] %v62
    %112 = vst [vmem:[#allocation5 + $0x150] sm:$0xff] %v63
    %113 = vst [vmem:[#allocation5 + $0x158] sm:$0xff] %v64
    %114 = vst [vmem:[#allocation5 + $0x160] sm:$0xff] %v65
    %115 = vst [vmem:[#allocation5 + $0x168] sm:$0xff] %v66
    %116 = vst [vmem:[#allocation5 + $0x170] sm:$0xff] %v67
    %117 = vst [vmem:[#allocation5 + $0x178] sm:$0xff] %v68
    %118 = vst [vmem:[#allocation5 + $0x180] sm:$0xff] %v69
    // Predicated region
    $region10: #{tpu_custom_call.1} parent=1 // pred_check
      _
    $region11: #{tpu_custom_call.1} parent=1 // pred_check_branch
      %120 = sbr.rel (0) target = $region13
    $region12: #{tpu_custom_call.1} parent=1 // pred_region
      %s122 = ssub.s32 6272, 6272
      %123 = vsyncadd [#allocation4], %s122
      %s125 = sshll.u32 [#allocation5], 4
      %s126 = int_to_ptr.vmem [resolvable:$true] %s125
      %128 = dma.vmem_to_hbm [thread:$0]  %s126, 6272, %s1, [#allocation4]
    $region13: #{tpu_custom_call.1} parent=1 // pred_fallthru
      _
    // Predicated region
    $region14: #{tpu_custom_call.1} parent=1 // pred_check
      _
    $region15: #{tpu_custom_call.1} parent=1 // pred_check_branch
      %130 = sbr.rel (0) target = $region17
    $region16: #{tpu_custom_call.1} parent=1 // pred_region
      %131 = dma.done [#allocation4], 6272
    $region17: #{tpu_custom_call.1} parent=1 // pred_fallthru
      _
    %132 = vsyncpa [#allocation3], 1
    %133 = vsyncpa [#allocation4], 1

</llo_original>
